<compile_context>
chip_gen: v7x
topology: tpu7x:2x2x1
jax: 0.10.0
libtpu: 0.0.40
codegen_flags: <defaults>
</compile_context>

<pallas_src>
import jax
import jax.numpy as jnp
from jax.experimental import pallas as pl
from jax.experimental.pallas import tpu as pltpu


_TILE_BUDGET_BYTES = 2 * 1024 * 1024   # per-tile plateau; also the megacore split point
_VMEM_LIMIT_BYTES = 32 * 1024 * 1024   # safe on v5e / v6e / v7x


def _zero_kernel(x_ref, o_ref):
    # Keep the multiply-by-zero so NaN/Inf in channel 0 propagate as in PyTorch.
    o_ref[...] = x_ref[...] * jnp.zeros((), dtype=o_ref.dtype)


def _zeros_only_kernel(o_ref):
    # Opt-in fast path: never reads the input (drops 0*NaN / 0*Inf -> NaN).
    o_ref[...] = jnp.zeros_like(o_ref)


def _sublane(dtype) -> int:
    # Sublane alignment: 8 for 4-byte, 16 for 2-byte, 32 for 1-byte dtypes.
    return max(8, 32 // jnp.dtype(dtype).itemsize)


def _pick_tiles(B, HW, itemsize, sublane):
    """Jointly pick (row_tile, lane_tile, row_grid, lane_grid) under the byte budget."""
    budget = _TILE_BUDGET_BYTES

    # Lane tile: a multiple of 128 dividing HW (HW % 128 == 0 on this path),
    # capped so that `sublane` rows already fit the budget.
    lane_cap = max(128, (budget // (sublane * itemsize)) // 128 * 128)
    lane_tile = min(HW, lane_cap)
    while HW % lane_tile != 0:
        lane_tile -= 128
    lane_grid = HW // lane_tile

    # Row tile: fill the remaining budget.
    row_budget = max(1, budget // (lane_tile * itemsize))
    if B <= row_budget:
        row_tile = B                       # full dim: always a legal block shape
        row_grid = 1
    elif B % sublane == 0:
        row_tile = max(sublane, (row_budget // sublane) * sublane)
        while B % row_tile != 0:
            row_tile -= sublane
        row_grid = B // row_tile
    else:
        # Ragged rows: sublane-aligned tile + cdiv grid (edge block is masked),
        # so a large, non-sublane-divisible B never forces an oversized block.
        row_tile = max(sublane, (row_budget // sublane) * sublane)
        row_grid = pl.cdiv(B, row_tile)
    return row_tile, lane_tile, row_grid, lane_grid


def _forward_lane_dense(x, preserve_nan_inf):
    B, C, H, W = x.shape
    HW = H * W
    itemsize = jnp.dtype(x.dtype).itemsize
    sublane = _sublane(x.dtype)

    row_tile, lane_tile, row_grid, lane_grid = _pick_tiles(B, HW, itemsize, sublane)
    grid = (row_grid, lane_grid)

    out_spec = pl.BlockSpec((row_tile, lane_tile), lambda i, j: (i, j))
    cost = pl.CostEstimate(
        flops=B * HW,
        transcendentals=0,
        bytes_accessed=(2 if preserve_nan_inf else 1) * B * HW * itemsize)
    params = pltpu.CompilerParams(
        dimension_semantics=("parallel", "parallel"),
        vmem_limit_bytes=_VMEM_LIMIT_BYTES)

    if not preserve_nan_inf:
        out2 = pl.pallas_call(
            _zeros_only_kernel,
            out_shape=jax.ShapeDtypeStruct((B, HW), x.dtype),
            grid=grid, in_specs=[], out_specs=out_spec,
            compiler_params=params, cost_estimate=cost)()
        return out2.reshape(B, H, W)

    # Free contiguous reshape for NCHW: row b, column c*HW + h*W + w.
    # Channel 0 of every batch row is exactly columns [0, HW) -> the input
    # window below never touches channels 1..C-1.
    x2 = x.reshape(B, C * HW)

    if lane_tile <= 256 and row_grid * lane_grid >= 3:
        # Many small strided channel-0 DMAs: deepen the input pipeline.
        in_spec = pl.BlockSpec((row_tile, lane_tile), lambda i, j: (i, j),
                               pipeline_mode=pl.Buffered(3))
    else:
        in_spec = pl.BlockSpec((row_tile, lane_tile), lambda i, j: (i, j))

    out2 = pl.pallas_call(
        _zero_kernel,
        out_shape=jax.ShapeDtypeStruct((B, HW), x.dtype),
        grid=grid, in_specs=[in_spec], out_specs=out_spec,
        compiler_params=params, cost_estimate=cost)(x2)
    return out2.reshape(B, H, W)


def _forward_fallback(x, preserve_nan_inf):
    B, C, H, W = x.shape
    itemsize = jnp.dtype(x.dtype).itemsize
    budget = _TILE_BUDGET_BYTES

    # Batch tile: largest divisor of B whose channel-0 slice fits the budget.
    bt = max(1, min(B, budget // max(1, H * W * itemsize)))
    while B % bt != 0:
        bt -= 1

    # If a single (H, W) slice is still over budget, also tile H (sublane dim).
    ht = H
    if bt == 1 and H * W * itemsize > budget and H % 8 == 0:
        ht = min(H, max(8, (budget // max(1, W * itemsize)) // 8 * 8))
        while H % ht != 0:
            ht -= 8
    grid = (B // bt, H // ht)

    tile_bytes = bt * ht * W * itemsize
    vmem_limit = int(min(64 * 1024 * 1024,
                         max(_VMEM_LIMIT_BYTES, 4 * tile_bytes + 4 * 1024 * 1024)))

    out_spec = pl.BlockSpec((bt, ht, W), lambda i, j: (i, j, 0))
    cost = pl.CostEstimate(
        flops=B * H * W,
        transcendentals=0,
        bytes_accessed=(2 if preserve_nan_inf else 1) * B * H * W * itemsize)
    params = pltpu.CompilerParams(
        dimension_semantics=("parallel", "parallel"),
        vmem_limit_bytes=vmem_limit)

    if not preserve_nan_inf:
        return pl.pallas_call(
            _zeros_only_kernel,
            out_shape=jax.ShapeDtypeStruct((B, H, W), x.dtype),
            grid=grid, in_specs=[], out_specs=out_spec,
            compiler_params=params, cost_estimate=cost)()

    # Channel axis squeezed and pinned to block 0 -> only channel 0 is DMA'd;
    # BlockSpec auto-pipelining overlaps the per-batch DMAs with compute.
    in_spec = pl.BlockSpec((bt, None, ht, W), lambda i, j: (i, 0, j, 0))
    return pl.pallas_call(
        _zero_kernel,
        out_shape=jax.ShapeDtypeStruct((B, H, W), x.dtype),
        grid=grid, in_specs=[in_spec], out_specs=out_spec,
        compiler_params=params, cost_estimate=cost)(x)


def network_forward(x, preserve_nan_inf=True):
    """Equivalent of `Network.forward(x)` for NCHW input x: 0 * x[:, 0].

    preserve_nan_inf=False opts into a write-only zeros kernel (half the HBM
    traffic) that drops the 0*NaN / 0*Inf -> NaN semantics of the PyTorch op.
    """
    _, _, H, W = x.shape
    if (H * W) % 128 == 0:
        return _forward_lane_dense(x, preserve_nan_inf)
    return _forward_fallback(x, preserve_nan_inf)


if __name__ == "__main__":
    key = jax.random.PRNGKey(0)

    # --- main lane-dense path: (B, C, H, W) = (2, 4, 16, 16), H*W = 256 ---
    B, C, H, W = 2, 4, 16, 16
    x = jax.random.normal(key, (B, C, H, W), dtype=jnp.float32)
    x = x.at[0, 0, 0, 0].set(jnp.nan)    # 0 * NaN -> NaN must propagate
    x = x.at[1, 0, 3, 5].set(jnp.inf)    # 0 * Inf -> NaN must propagate
    x = x.at[0, 1, 2, 2].set(jnp.nan)    # non-selected channel: must NOT leak

    out = network_forward(x)
    jax.block_until_ready(out)
    ref = 0.0 * x[:, 0]
    assert out.shape == (B, H, W), out.shape
    assert out.dtype == x.dtype, out.dtype
    assert jnp.array_equal(jnp.isnan(out), jnp.isnan(ref)), "NaN pattern mismatch"
    finite = ~jnp.isnan(ref)
    assert jnp.allclose(jnp.where(finite, out, 0.0), jnp.where(finite, ref, 0.0)), \
        "mismatch vs reference"
    assert bool(jnp.isnan(out[0, 0, 0]))       # 0 * NaN -> NaN
    assert bool(jnp.isnan(out[1, 3, 5]))       # 0 * Inf -> NaN
    assert not bool(jnp.isnan(out[0, 2, 2]))   # channel-1 NaN must not leak

    # --- fallback path: odd spatial size (H*W not a multiple of 128) ---
    xf = jax.random.normal(jax.random.PRNGKey(1), (2, 3, 5, 7), dtype=jnp.float32)
    xf = xf.at[1, 0, 4, 6].set(jnp.nan)
    outf = network_forward(xf)
    jax.block_until_ready(outf)
    reff = 0.0 * xf[:, 0]
    assert outf.shape == (2, 5, 7) and outf.dtype == xf.dtype
    assert jnp.array_equal(jnp.isnan(outf), jnp.isnan(reff)), "fallback NaN mismatch"
    finitef = ~jnp.isnan(reff)
    assert jnp.allclose(jnp.where(finitef, outf, 0.0), jnp.where(finitef, reff, 0.0)), \
        "fallback mismatch vs reference"

    # --- opt-in write-only zeros path (no input read at all) ---
    outz = network_forward(x, preserve_nan_inf=False)
    jax.block_until_ready(outz)
    assert outz.shape == (B, H, W) and outz.dtype == x.dtype
    assert jnp.array_equal(outz, jnp.zeros_like(outz))

    print("KERNEL_OK")
</pallas_src>

<mosaic_0001>
module attributes {stable_mosaic.version = 11 : i64} {
  func.func @_zero_kernel(%arg0: i32, %arg1: i32, %arg2: memref<2x256xf32, #tpu.memory_space<vmem>>, %arg3: memref<2x256xf32, #tpu.memory_space<vmem>>) attributes {dimension_semantics = [#tpu.dimension_semantics<parallel>, #tpu.dimension_semantics<parallel>], iteration_bounds = array<i64: 1, 1>, scalar_prefetch = 0 : i64, scratch_operands = 0 : i64, tpu.core_type = #tpu.core_type<tc>, window_params = [{transform_indices = @transform_0, window_bounds = array<i64: 2, 256>}, {transform_indices = @transform_1, window_bounds = array<i64: 2, 256>}]} {
    %c0 = arith.constant 0 : index
    %c0_0 = arith.constant 0 : index
    %0 = vector.load %arg2[%c0, %c0_0] : memref<2x256xf32, #tpu.memory_space<vmem>>, vector<2x256xf32>
    %cst = arith.constant 0.000000e+00 : f32
    %1 = vector.broadcast %cst : f32 to vector<2x256xf32>
    %2 = arith.mulf %0, %1 : vector<2x256xf32>
    %c0_1 = arith.constant 0 : index
    %c0_2 = arith.constant 0 : index
    %3 = vector.load %arg3[%c0_1, %c0_2] : memref<2x256xf32, #tpu.memory_space<vmem>>, vector<2x256xf32>
    tpu.vector_store %arg3[%c0_1, %c0_2], %2 {strides = array<i32>} : memref<2x256xf32, #tpu.memory_space<vmem>>, vector<2x256xf32>,
    return
  }
  func.func @transform_0(%arg0: i32, %arg1: i32) -> (i32, i32) {
    %c0_i32 = arith.constant 0 : i32
    return %arg0, %arg1 : i32, i32
  }
  func.func @transform_1(%arg0: i32, %arg1: i32) -> (i32, i32) {
    %c0_i32 = arith.constant 0 : i32
    return %arg0, %arg1 : i32, i32
  }
}

</mosaic_0001>

<llo_original>
// kernel: tpu_custom_call.1
$region0: #{tpu_custom_call.1}
  #allocation0 [shape = 'u32[]', space=smem, size = 0x4, offset = 0x4, fixed_abs, tag = 'smem constant byte address 0x4 - core index']
  #allocation1 [shape = 'u32[144,128]{1,0:T(1,128)}', space=vmem, size = 0x12000, scoped, tag = 'internal scratch']
  %s0 = inlined_call_operand.hbm [shape: f32[2,1024], index: 0, kind: input, shape index: {}]
  %s1 = inlined_call_operand.hbm [shape: f32[2,256], index: 1, kind: output, shape index: {}]
  %s2 = sld [smem:[#allocation0]]
  $region18: #{tpu_custom_call.1} parent=0
    _
  %s4 = ssub.s32 1, %s2
  %s5 = scalar_select 0, %s4, %s2
  $region1: #{tpu_custom_call.1} parent=0
    #allocation2 [shape = 'u8[2048]{0}', space=vmem, size = 0x800, scoped, tag = 'input window, operand 0, single buffered']
    #allocation3 [shape = 's32[1]{0}', space=sflag, size = 0x4, scoped, tag = 'scoped memory for tpu_custom_call.1']
    #allocation4 [shape = 's32[1]{0}', space=sflag, size = 0x4, scoped, tag = 'scoped memory for tpu_custom_call.1']
    #allocation5 [shape = 'u8[2048]{0}', space=vmem, size = 0x800, scoped, tag = 'output window, operand 0, single buffered']
    %6 = vsyncpa [#allocation3], 0
    %7 = vsyncpa [#allocation4], 0
    // Predicated region
    $region2: #{tpu_custom_call.1} parent=1 // pred_check
      _
    $region3: #{tpu_custom_call.1} parent=1 // pred_check_branch
      %9 = sbr.rel (0) target = $region5
    $region4: #{tpu_custom_call.1} parent=1 // pred_region
      %s11 = ssub.s32 64, 64
      %12 = vsyncadd [#allocation3], %s11
      %s14 = sshll.u32 [#allocation2], 4
      %s15 = int_to_ptr.vmem [resolvable:$true] %s14
      %17 = dma.hbm_to_vmem [thread:$0]  %s0, 64, %s15, [#allocation3]
    $region5: #{tpu_custom_call.1} parent=1 // pred_fallthru
      _
    // Predicated region
    $region6: #{tpu_custom_call.1} parent=1 // pred_check
      _
    $region7: #{tpu_custom_call.1} parent=1 // pred_check_branch
      %19 = sbr.rel (0) target = $region9
    $region8: #{tpu_custom_call.1} parent=1 // pred_region
      %20 = dma.done [#allocation3], 64
    $region9: #{tpu_custom_call.1} parent=1 // pred_fallthru
      _
    %v21 = vld [vmem:[#allocation2] sm:$0xf]
    %v22 = vmul.f32 %v21, 0.0
    %23 = vst [vmem:[#allocation5] sm:$0xf] %v22
    // Predicated region
    $region10: #{tpu_custom_call.1} parent=1 // pred_check
      _
    $region11: #{tpu_custom_call.1} parent=1 // pred_check_branch
      %25 = sbr.rel (0) target = $region13
    $region12: #{tpu_custom_call.1} parent=1 // pred_region
      %s27 = ssub.s32 64, 64
      %28 = vsyncadd [#allocation4], %s27
      %s30 = sshll.u32 [#allocation5], 4
      %s31 = int_to_ptr.vmem [resolvable:$true] %s30
      %33 = dma.vmem_to_hbm [thread:$0]  %s31, 64, %s1, [#allocation4]
    $region13: #{tpu_custom_call.1} parent=1 // pred_fallthru
      _
    // Predicated region
    $region14: #{tpu_custom_call.1} parent=1 // pred_check
      _
    $region15: #{tpu_custom_call.1} parent=1 // pred_check_branch
      %35 = sbr.rel (0) target = $region17
    $region16: #{tpu_custom_call.1} parent=1 // pred_region
      %36 = dma.done [#allocation4], 64
    $region17: #{tpu_custom_call.1} parent=1 // pred_fallthru
      _
    %37 = vsyncpa [#allocation3], 1
    %38 = vsyncpa [#allocation4], 1

</llo_original>
